<compile_context>
chip_gen: v5e
topology: v5e:2x2
jax: 0.10.0
libtpu: 0.0.40
codegen_flags: <defaults>
</compile_context>

<pallas_src>
import numpy as np
import jax
import jax.numpy as jnp
from jax.experimental import pallas as pl
from jax.experimental.pallas import tpu as pltpu


# ---------------------------------------------------------------------------
# Constant operator matrices (built host-side, fed to the kernel as inputs)
# ---------------------------------------------------------------------------
def _avgpool_matrix(in_size: int, k: int) -> np.ndarray:
    """(out, in) matrix performing 1-D average pooling with kernel=stride=k."""
    out = in_size // k
    m = np.zeros((out, in_size), dtype=np.float32)
    for o in range(out):
        m[o, o * k:(o + 1) * k] = 1.0 / k
    return m


def _bilinear_matrix(out_size: int, in_size: int) -> np.ndarray:
    """(out, in) matrix of PyTorch bilinear (align_corners=False) 1-D weights."""
    m = np.zeros((out_size, in_size), dtype=np.float32)
    scale = in_size / out_size
    for d in range(out_size):
        src = (d + 0.5) * scale - 0.5
        if src < 0.0:
            src = 0.0
        x0 = min(int(np.floor(src)), in_size - 1)
        x1 = min(x0 + 1, in_size - 1)
        l1 = src - x0
        m[d, x0] += 1.0 - l1
        m[d, x1] += l1
    return m


def _temporal_blend_matrix(t: int) -> np.ndarray:
    """(T, T) matrix realizing AvgPool3d time-kernel-2, stride 1, pad 1,
    count_include_pad=False, followed by dropping the last output frame:
      out[0] = x[0];   out[t] = 0.5*(x[t-1] + x[t])  for t >= 1."""
    m = np.zeros((t, t), dtype=np.float32)
    m[0, 0] = 1.0
    for i in range(1, t):
        m[i, i] = 0.5
        m[i, i - 1] = 0.5
    return m


# ---------------------------------------------------------------------------
# Fused Pallas kernel: all pyramid levels, one batch element per grid step
# ---------------------------------------------------------------------------
def _fused_kernel(x_ref, pool_ref, wt_ref, b_ref, mask_ref, up_ref, o_ref):
    # x_ref    : (1, C_in*T, HW)          input slab (dtype = caller's dtype)
    # pool_ref : (HW, S)                  hstacked spatial avg-pool operators
    # wt_ref   : (L*C_red*T, C_in*T)      vstacked kron(W_eff, Tmat) per level
    # b_ref    : (L*C_red*T, 1)           folded BN bias per (level, channel, t)
    # mask_ref : (L*C_red*T, S)           0/1 block-diagonal level selector
    # up_ref   : (S, HW)                  vstacked bilinear upsample operators
    # o_ref    : (1, L*C_red*T, HW)       fused output slab (one dense store)

    # (1) spatial average-pool for ALL levels in one matmul.  Upcast happens
    #     as the immediate matmul operand (no long-lived f32 copy of x).
    pooled = jnp.dot(x_ref[0].astype(jnp.float32), pool_ref[...],
                     preferred_element_type=jnp.float32)        # (CinT, S)

    # (2) temporal blend + 1x1x1 conv + folded BN for ALL levels, bias + ReLU
    #     on the VPU, then zero the cross-level blocks.
    mixed = jnp.maximum(
        jnp.dot(wt_ref[...], pooled, preferred_element_type=jnp.float32)
        + b_ref[...], 0.0) * mask_ref[...]                      # (LCRT, S)

    # (3) bilinear upsample for ALL levels + single lane-dense store.
    out = jnp.dot(mixed, up_ref[...],
                  preferred_element_type=jnp.float32)           # (LCRT, HW)
    o_ref[0, :, :] = out.astype(o_ref.dtype)


# ---------------------------------------------------------------------------
# Wrapper
# ---------------------------------------------------------------------------
def pyramid_spatio_temporal_pooling(x, pool_sizes, params):
    b, c_in, t, h, w = x.shape
    hw = h * w
    num_levels = len(pool_sizes)
    c_red = params[0][0].shape[0]
    crt = c_red * t
    lcrt = num_levels * crt
    cint = c_in * t

    tmat = jnp.asarray(_temporal_blend_matrix(t))

    pool_cols, up_rows, wt_rows, b_rows, hkwks = [], [], [], [], []
    for lvl, (kt, kh, kw) in enumerate(pool_sizes):
        assert kt == 2, "time kernel must be 2"
        # TODO(synk): PyTorch AvgPool3d floors for non-divisible sizes; we
        # require exact divisibility.
        assert h % kh == 0 and w % kw == 0, "spatial pool must divide H, W"
        hk, wk = h // kh, w // kw
        hkwks.append(hk * wk)

        # spatial avg-pool operator, (HW, hk*wk); global level -> 1/HW column.
        pool_cols.append(
            np.kron(_avgpool_matrix(h, kh), _avgpool_matrix(w, kw)).T)
        # bilinear upsample operator, (hk*wk, HW); global level -> ones row.
        up_rows.append(
            np.kron(_bilinear_matrix(h, hk), _bilinear_matrix(w, wk)).T)

        w_eff, b_eff = params[lvl]                     # (C_red, C_in), (C_red, 1)
        # Fold the temporal blend into the conv+BN weights: kron(W_eff, Tmat)
        # acts on rows indexed (channel, time), time minor.
        wt_rows.append(jnp.kron(w_eff, tmat))          # (C_red*T, C_in*T)
        b_rows.append(jnp.repeat(b_eff, t, axis=0))    # (C_red*T, 1)

    s = int(sum(hkwks))
    pool_all = jnp.asarray(np.concatenate(pool_cols, axis=1))      # (HW, S)
    up_all = jnp.asarray(np.concatenate(up_rows, axis=0))          # (S, HW)
    wt_all = jnp.concatenate(wt_rows, axis=0)                      # (LCRT, CinT)
    b_all = jnp.concatenate(b_rows, axis=0)                        # (LCRT, 1)

    # 0/1 block-diagonal mask: row block l only keeps its own column block.
    mask_np = np.zeros((lcrt, s), dtype=np.float32)
    off = 0
    for lvl, hkwk in enumerate(hkwks):
        mask_np[lvl * crt:(lvl + 1) * crt, off:off + hkwk] = 1.0
        off += hkwk
    mask = jnp.asarray(mask_np)

    # Lane-dense presentation: flatten (H, W) -> H*W and merge (C_in, T) into
    # the sublane axis.  Works for f32 or bf16 x (bf16 halves HBM DMA bytes).
    x_flat = x.reshape(b, cint, hw)

    op_arrays = (pool_all, wt_all, b_all, mask, up_all)
    const2d = lambda bi: (0, 0)
    op_specs = [pl.BlockSpec(a.shape, const2d) for a in op_arrays]

    # Advisory cost estimate for XLA scheduling around the call.
    itemsize = x.dtype.itemsize
    flops = int(2 * b * (cint * hw * s + lcrt * cint * s + lcrt * s * hw))
    op_bytes = int(sum(int(a.size) for a in op_arrays) * 4)
    bytes_accessed = int((b * cint * hw + b * lcrt * hw) * itemsize + op_bytes)
    cost = pl.CostEstimate(flops=flops, transcendentals=0,
                           bytes_accessed=bytes_accessed)

    # Explicit VMEM budget (v7x has 64 MiB physical / 32 MiB default scoped):
    # double-buffered input + output blocks + operator tiles, plus slack.
    x_block = cint * hw * itemsize
    o_block = lcrt * hw * itemsize
    needed = 2 * (x_block + o_block + op_bytes) + (4 << 20)
    vmem_limit = int(min(max(needed, 32 << 20), 100 << 20))

    out_flat = pl.pallas_call(
        _fused_kernel,
        out_shape=jax.ShapeDtypeStruct((b, lcrt, hw), x.dtype),
        grid=(b,),
        in_specs=[pl.BlockSpec((1, cint, hw), lambda bi: (bi, 0, 0))]
                 + op_specs,
        out_specs=pl.BlockSpec((1, lcrt, hw), lambda bi: (bi, 0, 0)),
        compiler_params=pltpu.CompilerParams(
            dimension_semantics=("parallel",),
            vmem_limit_bytes=vmem_limit),
        cost_estimate=cost,
    )(x_flat, *op_arrays)

    # (B, levels*C_red*T, H*W) -> (B, levels*C_red, T, H, W): matches the
    # PyTorch channel-axis concatenation of the per-level outputs.
    return out_flat.reshape(b, num_levels * c_red, t, h, w)


# ---------------------------------------------------------------------------
# Deterministic parameter init (Conv3d 1x1x1 no-bias + BatchNorm3d folded)
# ---------------------------------------------------------------------------
def init_params(key, in_channels, reduction_channels, num_levels):
    params = []
    for _ in range(num_levels):
        k1, k2, k3, k4, k5, key = jax.random.split(key, 6)
        conv_w = 0.1 * jax.random.normal(k1, (reduction_channels, in_channels),
                                         jnp.float32)
        gamma = 1.0 + 0.1 * jax.random.normal(k2, (reduction_channels,), jnp.float32)
        beta = 0.1 * jax.random.normal(k3, (reduction_channels,), jnp.float32)
        running_mean = 0.1 * jax.random.normal(k4, (reduction_channels,), jnp.float32)
        running_var = jnp.abs(
            1.0 + 0.1 * jax.random.normal(k5, (reduction_channels,), jnp.float32))
        eps = 1e-5
        scale = gamma / jnp.sqrt(running_var + eps)
        w_eff = conv_w * scale[:, None]                          # (C_red, C_in)
        b_eff = (beta - running_mean * scale).reshape(reduction_channels, 1)
        params.append((w_eff, b_eff))
    return params


# ---------------------------------------------------------------------------
# Pure-JAX reference (sanity check of the kernel)
# ---------------------------------------------------------------------------
def reference_forward(x, pool_sizes, params):
    b, c_in, t, h, w = x.shape
    x_prev = jnp.concatenate([x[:, :, :1], x[:, :, :-1]], axis=2)
    blend = 0.5 * (x + x_prev)
    outs = []
    for lvl, (kt, kh, kw) in enumerate(pool_sizes):
        hk, wk = h // kh, w // kw
        w_eff, b_eff = params[lvl]
        pr = jnp.asarray(_avgpool_matrix(h, kh))
        pc = jnp.asarray(_avgpool_matrix(w, kw))
        wr = jnp.asarray(_bilinear_matrix(h, hk))
        wc = jnp.asarray(_bilinear_matrix(w, wk))
        pooled = jnp.einsum('Hh,bcthw,Ww->bctHW', pr, blend, pc)
        mix = jnp.einsum('oc,bcthw->bothw', w_eff, pooled)
        mix = jnp.maximum(mix + b_eff.reshape(1, -1, 1, 1, 1), 0.0)
        up = jnp.einsum('Hh,bothw,Ww->botHW', wr, mix, wc)
        outs.append(up)
    return jnp.concatenate(outs, axis=1)


if __name__ == "__main__":
    key = jax.random.PRNGKey(0)
    b, c_in, t, h, w = 2, 4, 8, 16, 16
    c_red = 8
    pool_sizes = [(2, h, w), (2, h // 2, w // 2), (2, h // 4, w // 4)]

    kx, kp = jax.random.split(key)
    x = jax.random.normal(kx, (b, c_in, t, h, w), jnp.float32)
    params = init_params(kp, c_in, c_red, len(pool_sizes))

    ref = jax.block_until_ready(reference_forward(x, pool_sizes, params))

    # f32 path: tight tolerance.
    out = pyramid_spatio_temporal_pooling(x, pool_sizes, params)
    out = jax.block_until_ready(out)
    assert out.shape == (b, c_red * len(pool_sizes), t, h, w), out.shape
    max_err = float(jnp.max(jnp.abs(out - ref)))
    assert max_err < 1e-4, f"f32 mismatch vs reference: {max_err}"

    # bf16 data path (halved HBM DMA, f32 accumulation): relaxed tolerance.
    out_bf = pyramid_spatio_temporal_pooling(
        x.astype(jnp.bfloat16), pool_sizes, params)
    out_bf = jax.block_until_ready(out_bf)
    max_err_bf = float(jnp.max(jnp.abs(out_bf.astype(jnp.float32) - ref)))
    assert max_err_bf < 1e-1, f"bf16 mismatch vs reference: {max_err_bf}"

    print("KERNEL_OK")
</pallas_src>

<mosaic_0001>
module attributes {stable_mosaic.version = 11 : i64} {
  func.func @_fused_kernel(%arg0: i32, %arg1: memref<1x32x256xf32, #tpu.memory_space<vmem>>, %arg2: memref<256x21xf32, #tpu.memory_space<vmem>>, %arg3: memref<192x32xf32, #tpu.memory_space<vmem>>, %arg4: memref<192x1xf32, #tpu.memory_space<vmem>>, %arg5: memref<192x21xf32, #tpu.memory_space<vmem>>, %arg6: memref<21x256xf32, #tpu.memory_space<vmem>>, %arg7: memref<1x192x256xf32, #tpu.memory_space<vmem>>) attributes {dimension_semantics = [#tpu.dimension_semantics<parallel>], iteration_bounds = array<i64: 2>, scalar_prefetch = 0 : i64, scratch_operands = 0 : i64, tpu.core_type = #tpu.core_type<tc>, window_params = [{transform_indices = @transform_0, window_bounds = array<i64: 1, 32, 256>}, {pipeline_mode = #tpu.pipeline_mode<synchronous>, transform_indices = @transform_1, window_bounds = array<i64: 256, 21>}, {pipeline_mode = #tpu.pipeline_mode<synchronous>, transform_indices = @transform_2, window_bounds = array<i64: 192, 32>}, {pipeline_mode = #tpu.pipeline_mode<synchronous>, transform_indices = @transform_3, window_bounds = array<i64: 192, 1>}, {pipeline_mode = #tpu.pipeline_mode<synchronous>, transform_indices = @transform_4, window_bounds = array<i64: 192, 21>}, {pipeline_mode = #tpu.pipeline_mode<synchronous>, transform_indices = @transform_5, window_bounds = array<i64: 21, 256>}, {transform_indices = @transform_6, window_bounds = array<i64: 1, 192, 256>}]} {
    %c0 = arith.constant 0 : index
    %c0_0 = arith.constant 0 : index
    %c0_1 = arith.constant 0 : index
    %0 = vector.load %arg1[%c0, %c0_0, %c0_1] : memref<1x32x256xf32, #tpu.memory_space<vmem>>, vector<1x32x256xf32>
    %1 = vector.shape_cast %0 : vector<1x32x256xf32> to vector<32x256xf32>
    %c0_2 = arith.constant 0 : index
    %c0_3 = arith.constant 0 : index
    %2 = vector.load %arg2[%c0_2, %c0_3] : memref<256x21xf32, #tpu.memory_space<vmem>>, vector<256x21xf32>
    %cst = arith.constant dense<0.000000e+00> : vector<32x21xf32>
    %3 = tpu.matmul %1, %2, %cst {dimension_numbers = #tpu.dot_dimension_numbers<[1], [0], [0], [1], [0, 0, 1, 1], [], []>} : vector<32x256xf32>, vector<256x21xf32>, vector<32x21xf32> -> vector<32x21xf32>
    %c0_4 = arith.constant 0 : index
    %c0_5 = arith.constant 0 : index
    %4 = vector.load %arg3[%c0_4, %c0_5] : memref<192x32xf32, #tpu.memory_space<vmem>>, vector<192x32xf32>
    %cst_6 = arith.constant dense<0.000000e+00> : vector<192x21xf32>
    %5 = tpu.matmul %4, %3, %cst_6 {dimension_numbers = #tpu.dot_dimension_numbers<[1], [0], [0], [1], [0, 0, 1, 1], [], []>} : vector<192x32xf32>, vector<32x21xf32>, vector<192x21xf32> -> vector<192x21xf32>
    %c0_7 = arith.constant 0 : index
    %c0_8 = arith.constant 0 : index
    %6 = vector.load %arg4[%c0_7, %c0_8] : memref<192x1xf32, #tpu.memory_space<vmem>>, vector<192x1xf32>
    %7 = vector.broadcast %6 : vector<192x1xf32> to vector<192x21xf32>
    %8 = arith.addf %5, %7 : vector<192x21xf32>
    %cst_9 = arith.constant 0.000000e+00 : f32
    %9 = vector.broadcast %cst_9 : f32 to vector<192x21xf32>
    %10 = arith.maximumf %8, %9 : vector<192x21xf32>
    %c0_10 = arith.constant 0 : index
    %c0_11 = arith.constant 0 : index
    %11 = vector.load %arg5[%c0_10, %c0_11] : memref<192x21xf32, #tpu.memory_space<vmem>>, vector<192x21xf32>
    %12 = arith.mulf %10, %11 : vector<192x21xf32>
    %c0_12 = arith.constant 0 : index
    %c0_13 = arith.constant 0 : index
    %13 = vector.load %arg6[%c0_12, %c0_13] : memref<21x256xf32, #tpu.memory_space<vmem>>, vector<21x256xf32>
    %cst_14 = arith.constant dense<0.000000e+00> : vector<192x256xf32>
    %14 = tpu.matmul %12, %13, %cst_14 {dimension_numbers = #tpu.dot_dimension_numbers<[1], [0], [0], [1], [0, 0, 1, 1], [], []>} : vector<192x21xf32>, vector<21x256xf32>, vector<192x256xf32> -> vector<192x256xf32>
    %c0_15 = arith.constant 0 : index
    %c0_16 = arith.constant 0 : index
    %c0_17 = arith.constant 0 : index
    %15 = vector.load %arg7[%c0_15, %c0_16, %c0_17] : memref<1x192x256xf32, #tpu.memory_space<vmem>>, vector<1x192x256xf32>
    %16 = vector.shape_cast %15 : vector<1x192x256xf32> to vector<192x256xf32>
    %17 = vector.shape_cast %14 : vector<192x256xf32> to vector<1x192x256xf32>
    tpu.vector_store %arg7[%c0_15, %c0_16, %c0_17], %17 {strides = array<i32>} : memref<1x192x256xf32, #tpu.memory_space<vmem>>, vector<1x192x256xf32>,
    return
  }
  func.func @transform_0(%arg0: i32) -> (i32, i32, i32) {
    %c0_i32 = arith.constant 0 : i32
    %c0_i32_0 = arith.constant 0 : i32
    %c0_i32_1 = arith.constant 0 : i32
    return %arg0, %c0_i32, %c0_i32_0 : i32, i32, i32
  }
  func.func @transform_1(%arg0: i32) -> (i32, i32) {
    %c0_i32 = arith.constant 0 : i32
    %c0_i32_0 = arith.constant 0 : i32
    %c0_i32_1 = arith.constant 0 : i32
    return %c0_i32, %c0_i32_0 : i32, i32
  }
  func.func @transform_2(%arg0: i32) -> (i32, i32) {
    %c0_i32 = arith.constant 0 : i32
    %c0_i32_0 = arith.constant 0 : i32
    %c0_i32_1 = arith.constant 0 : i32
    return %c0_i32, %c0_i32_0 : i32, i32
  }
  func.func @transform_3(%arg0: i32) -> (i32, i32) {
    %c0_i32 = arith.constant 0 : i32
    %c0_i32_0 = arith.constant 0 : i32
    %c0_i32_1 = arith.constant 0 : i32
    return %c0_i32, %c0_i32_0 : i32, i32
  }
  func.func @transform_4(%arg0: i32) -> (i32, i32) {
    %c0_i32 = arith.constant 0 : i32
    %c0_i32_0 = arith.constant 0 : i32
    %c0_i32_1 = arith.constant 0 : i32
    return %c0_i32, %c0_i32_0 : i32, i32
  }
  func.func @transform_5(%arg0: i32) -> (i32, i32) {
    %c0_i32 = arith.constant 0 : i32
    %c0_i32_0 = arith.constant 0 : i32
    %c0_i32_1 = arith.constant 0 : i32
    return %c0_i32, %c0_i32_0 : i32, i32
  }
  func.func @transform_6(%arg0: i32) -> (i32, i32, i32) {
    %c0_i32 = arith.constant 0 : i32
    %c0_i32_0 = arith.constant 0 : i32
    %c0_i32_1 = arith.constant 0 : i32
    return %arg0, %c0_i32, %c0_i32_0 : i32, i32, i32
  }
}

</mosaic_0001>

<llo_original>
// kernel: tpu_custom_call.1
$region0: #{tpu_custom_call.1}
  #allocation0 [shape = 'u32[]', space=smem, size = 0x4, offset = 0x4, fixed_abs, tag = 'smem constant byte address 0x4 - core index']
  #allocation1 [shape = 'u32[72,128]{1,0:T(1,128)}', space=vmem, size = 0x9000, scoped, tag = 'internal scratch']
  %s0 = inlined_call_operand.vmem [shape: f32[2,32,256], index: 0, kind: input, shape index: {}]
  %s1 = inlined_call_operand.vmem [shape: f32[256,21], index: 1, kind: input, shape index: {}]
  %s2 = inlined_call_operand.vmem [shape: f32[192,32], index: 2, kind: input, shape index: {}]
  %s3 = inlined_call_operand.vmem [shape: f32[192,1], index: 3, kind: input, shape index: {}]
  %s4 = inlined_call_operand.vmem [shape: f32[192,21], index: 4, kind: input, shape index: {}]
  %s5 = inlined_call_operand.vmem [shape: f32[21,256], index: 5, kind: input, shape index: {}]
  %s6 = inlined_call_operand.hbm [shape: f32[2,192,256], index: 6, kind: output, shape index: {}]
  %s7 = sld [smem:[#allocation0]]
  $region57: #{tpu_custom_call.1} parent=0
    _
  %s9 = ssub.s32 1, %s7
  %s10 = scalar_select 0, %s9, %s7
  $region1: #{tpu_custom_call.1} parent=0
    #allocation2 [shape = 'u8[393216]{0}', space=vmem, size = 0x60000, scoped, tag = 'output window, operand 0']
    #allocation3 [shape = 's32[2]{0}', space=sflag, size = 0x8, scoped, tag = 'scoped memory for tpu_custom_call.1']
    %11 = vsyncpa [#allocation3], 0
    %s12 = scalar_lea.sflag [#allocation3], 1
    %13 = vsyncpa %s12, 0
    loop: start=0, step=1, limit=4
    $region2: #{tpu_custom_call.1} parent=1 // loop_pre_header
      _
    $region3: #{tpu_custom_call.1} parent=1 // loop_header
      %s15 = sphi 0, %s19
      %p16 = scmp.ge.s32.totalorder %s15, 4
      %s25 = sphi 0, %s27
      %s28 = sphi 0, %s25
      %s29 = sphi 0, %s28
      %s45 = sphi 0, %s29
      %s49 = sphi 0, %s49
      %s51 = sphi 0, %s49
      %s52 = sphi 0, %s51
      %s66 = sphi 0, %s52
      %s70 = sphi 0, %s70
      %s72 = sphi 0, %s70
      %s73 = sphi 0, %s72
      %s87 = sphi 0, %s73
      %s91 = sphi 0, %s91
      %s93 = sphi 0, %s91
      %s94 = sphi 0, %s93
      %s108 = sphi 0, %s94
      %s112 = sphi 0, %s112
      %s114 = sphi 0, %s112
      %s115 = sphi 0, %s114
      %s129 = sphi 0, %s115
      %s133 = sphi 0, %s133
      %s135 = sphi 0, %s133
      %s136 = sphi 0, %s135
      %s150 = sphi 0, %s136
      %s156 = sphi 0, %s158
      %s159 = sphi 0, %s156
      %s160 = sphi 0, %s159
      %s176 = sphi 0, %s160
    $region4: #{tpu_custom_call.1} parent=1 // loop_header_branch
      %18 = sbr.rel (%p16) target = $region8
    $region5: #{tpu_custom_call.1} parent=1 // loop_body
      %s20 = ssub.s32 %s15, 1
      %s21 = ssub.s32 %s15, 2
      %s22 = sadd.s32 %s15, 1
      %s23 = ssub.s32 %s15, %s22
      %p24 = scmp.eq.s32.totalorder %s23, 0
      %s26 = sadd.s32 %s25, 1
      %s27 = scalar_select %p24, %s25, %s26
      %p30 = pneg %p24
      %p31 = scmp.eq.s32.totalorder %s15, 1
      %p32 = por %p30, %p31
      %p33 = scmp.ne.s32.totalorder %s25, %s28
      %p34 = scmp.eq.s32.totalorder %s15, 0
      %p35 = por %p33, %p34
      %p36 = scmp.ne.s32.totalorder %s25, %s28
      %p37 = scmp.eq.s32.totalorder %s20, 1
      %p38 = por %p36, %p37
      %p39 = scmp.ne.s32.totalorder %s28, %s29
      %p40 = scmp.eq.s32.totalorder %s20, 0
      %p41 = por %p39, %p40
      %p42 = scmp.ne.s32.totalorder %s28, %s29
      %p43 = scmp.eq.s32.totalorder %s21, 1
      %p44 = por %p42, %p43
      %p46 = scmp.ne.s32.totalorder %s29, %s45
      %p47 = scmp.eq.s32.totalorder %s21, 0
      %p48 = por %p46, %p47
      %s50 = sadd.s32 %s49, 1
      %p53 = scmp.eq.s32.totalorder %s15, 1
      %p54 = scmp.ne.s32.totalorder %s49, %s51
      %p55 = scmp.eq.s32.totalorder %s15, 0
      %p56 = por %p54, %p55
      %p57 = scmp.ne.s32.totalorder %s49, %s51
      %p58 = scmp.eq.s32.totalorder %s20, 1
      %p59 = por %p57, %p58
      %p60 = scmp.ne.s32.totalorder %s51, %s52
      %p61 = scmp.eq.s32.totalorder %s20, 0
      %p62 = por %p60, %p61
      %p63 = scmp.ne.s32.totalorder %s51, %s52
      %p64 = scmp.eq.s32.totalorder %s21, 1
      %p65 = por %p63, %p64
      %p67 = scmp.ne.s32.totalorder %s52, %s66
      %p68 = scmp.eq.s32.totalorder %s21, 0
      %p69 = por %p67, %p68
      %s71 = sadd.s32 %s70, 1
      %p74 = scmp.eq.s32.totalorder %s15, 1
      %p75 = scmp.ne.s32.totalorder %s70, %s72
      %p76 = scmp.eq.s32.totalorder %s15, 0
      %p77 = por %p75, %p76
      %p78 = scmp.ne.s32.totalorder %s70, %s72
      %p79 = scmp.eq.s32.totalorder %s20, 1
      %p80 = por %p78, %p79
      %p81 = scmp.ne.s32.totalorder %s72, %s73
      %p82 = scmp.eq.s32.totalorder %s20, 0
      %p83 = por %p81, %p82
      %p84 = scmp.ne.s32.totalorder %s72, %s73
      %p85 = scmp.eq.s32.totalorder %s21, 1
      %p86 = por %p84, %p85
      %p88 = scmp.ne.s32.totalorder %s73, %s87
      %p89 = scmp.eq.s32.totalorder %s21, 0
      %p90 = por %p88, %p89
      %s92 = sadd.s32 %s91, 1
      %p95 = scmp.eq.s32.totalorder %s15, 1
      %p96 = scmp.ne.s32.totalorder %s91, %s93
      %p97 = scmp.eq.s32.totalorder %s15, 0
      %p98 = por %p96, %p97
      %p99 = scmp.ne.s32.totalorder %s91, %s93
      %p100 = scmp.eq.s32.totalorder %s20, 1
      %p101 = por %p99, %p100
      %p102 = scmp.ne.s32.totalorder %s93, %s94
      %p103 = scmp.eq.s32.totalorder %s20, 0
      %p104 = por %p102, %p103
      %p105 = scmp.ne.s32.totalorder %s93, %s94
      %p106 = scmp.eq.s32.totalorder %s21, 1
      %p107 = por %p105, %p106
      %p109 = scmp.ne.s32.totalorder %s94, %s108
      %p110 = scmp.eq.s32.totalorder %s21, 0
      %p111 = por %p109, %p110
      %s113 = sadd.s32 %s112, 1
      %p116 = scmp.eq.s32.totalorder %s15, 1
      %p117 = scmp.ne.s32.totalorder %s112, %s114
      %p118 = scmp.eq.s32.totalorder %s15, 0
      %p119 = por %p117, %p118
      %p120 = scmp.ne.s32.totalorder %s112, %s114
      %p121 = scmp.eq.s32.totalorder %s20, 1
      %p122 = por %p120, %p121
      %p123 = scmp.ne.s32.totalorder %s114, %s115
      %p124 = scmp.eq.s32.totalorder %s20, 0
      %p125 = por %p123, %p124
      %p126 = scmp.ne.s32.totalorder %s114, %s115
      %p127 = scmp.eq.s32.totalorder %s21, 1
      %p128 = por %p126, %p127
      %p130 = scmp.ne.s32.totalorder %s115, %s129
      %p131 = scmp.eq.s32.totalorder %s21, 0
      %p132 = por %p130, %p131
      %s134 = sadd.s32 %s133, 1
      %p137 = scmp.eq.s32.totalorder %s15, 1
      %p138 = scmp.ne.s32.totalorder %s133, %s135
      %p139 = scmp.eq.s32.totalorder %s15, 0
      %p140 = por %p138, %p139
      %p141 = scmp.ne.s32.totalorder %s133, %s135
      %p142 = scmp.eq.s32.totalorder %s20, 1
      %p143 = por %p141, %p142
      %p144 = scmp.ne.s32.totalorder %s135, %s136
      %p145 = scmp.eq.s32.totalorder %s20, 0
      %p146 = por %p144, %p145
      %p147 = scmp.ne.s32.totalorder %s135, %s136
      %p148 = scmp.eq.s32.totalorder %s21, 1
      %p149 = por %p147, %p148
      %p151 = scmp.ne.s32.totalorder %s136, %s150
      %p152 = scmp.eq.s32.totalorder %s21, 0
      %p153 = por %p151, %p152
      %s154 = ssub.s32 %s15, %s22
      %p155 = scmp.eq.s32.totalorder %s154, 0
      %s157 = sadd.s32 %s156, 1
      %s158 = scalar_select %p155, %s156, %s157
      %p161 = pneg %p155
      %p162 = scmp.eq.s32.totalorder %s15, 1
      %p163 = por %p161, %p162
      %p164 = scmp.ne.s32.totalorder %s156, %s159
      %p165 = scmp.eq.s32.totalorder %s15, 0
      %p166 = por %p164, %p165
      %p167 = scmp.ne.s32.totalorder %s156, %s159
      %p168 = scmp.eq.s32.totalorder %s20, 1
      %p169 = por %p167, %p168
      %p170 = scmp.ne.s32.totalorder %s159, %s160
      %p171 = scmp.eq.s32.totalorder %s20, 0
      %p172 = por %p170, %p171
      %p173 = scmp.ne.s32.totalorder %s159, %s160
      %p174 = scmp.eq.s32.totalorder %s21, 1
      %p175 = por %p173, %p174
      %p177 = scmp.ne.s32.totalorder %s160, %s176
      %p178 = scmp.eq.s32.totalorder %s21, 0
      %p179 = por %p177, %p178
      %p180 = scmp.le.s32.totalorder 1, %s15
      %p181 = scmp.lt.s32.totalorder %s15, 3
      %p182 = pnand %p180, %p181
      %p183 = pneg %p182
      // Predicated region
      $region9: #{tpu_custom_call.1} parent=5 // pred_check
        _
      $region10: #{tpu_custom_call.1} parent=5 // pred_check_branch
        %185 = sbr.rel (%p182) target = $region12
      $region11: #{tpu_custom_call.1} parent=5 // pred_region
        %s186 = ssub.s32 %s15, 1
        // Predicated region
        $region13: #{tpu_custom_call.1} parent=11 // pred_check
          %p187 = pneg %p62
        $region14: #{tpu_custom_call.1} parent=11 // pred_check_branch
          %189 = sbr.rel (%p187) target = $region16
        $region15: #{tpu_custom_call.1} parent=11 // pred_region
          _
        $region16: #{tpu_custom_call.1} parent=11 // pred_fallthru
          _
        // Predicated region
        $region17: #{tpu_custom_call.1} parent=11 // pred_check
          %p190 = pneg %p83
        $region18: #{tpu_custom_call.1} parent=11 // pred_check_branch
          %192 = sbr.rel (%p190) target = $region20
        $region19: #{tpu_custom_call.1} parent=11 // pred_region
          _
        $region20: #{tpu_custom_call.1} parent=11 // pred_fallthru
          _
        // Predicated region
        $region21: #{tpu_custom_call.1} parent=11 // pred_check
          %p193 = pneg %p104
        $region22: #{tpu_custom_call.1} parent=11 // pred_check_branch
          %195 = sbr.rel (%p193) target = $region24
        $region23: #{tpu_custom_call.1} parent=11 // pred_region
          _
        $region24: #{tpu_custom_call.1} parent=11 // pred_fallthru
          _
        // Predicated region
        $region25: #{tpu_custom_call.1} parent=11 // pred_check
          %p196 = pneg %p125
        $region26: #{tpu_custom_call.1} parent=11 // pred_check_branch
          %198 = sbr.rel (%p196) target = $region28
        $region27: #{tpu_custom_call.1} parent=11 // pred_region
          _
        $region28: #{tpu_custom_call.1} parent=11 // pred_fallthru
          _
        // Predicated region
        $region29: #{tpu_custom_call.1} parent=11 // pred_check
          %p199 = pneg %p146
        $region30: #{tpu_custom_call.1} parent=11 // pred_check_branch
          %201 = sbr.rel (%p199) target = $region32
        $region31: #{tpu_custom_call.1} parent=11 // pred_region
          _
        $region32: #{tpu_custom_call.1} parent=11 // pred_fallthru
          _
      $region12: #{tpu_custom_call.1} parent=5 // pred_fallthru
        _
      %p202 = scmp.lt.s32.totalorder %s15, 2
      // Predicated region
      $region33: #{tpu_custom_call.1} parent=5 // pred_check
        %p203 = pneg %p202
      $region34: #{tpu_custom_call.1} parent=5 // pred_check_branch
        %205 = sbr.rel (%p203) target = $region36
      $region35: #{tpu_custom_call.1} parent=5 // pred_region
        // Predicated region
        $region37: #{tpu_custom_call.1} parent=35 // pred_check
          %p206 = pneg %p35
        $region38: #{tpu_custom_call.1} parent=35 // pred_check_branch
          %208 = sbr.rel (%p206) target = $region40
        $region39: #{tpu_custom_call.1} parent=35 // pred_region
          %p209 = scmp.lt.s32.totalorder %s15, 1
          %s210 = scalar_select %p209, %s15, 1
          %s211 = smul.addr %s210, 8
          %s212 = smul.addr %s211, 8
          %s213 = scalar_lea.vmem %s0, %s212
        $region40: #{tpu_custom_call.1} parent=35 // pred_fallthru
          _
      $region36: #{tpu_custom_call.1} parent=5 // pred_fallthru
        _
      %p214 = scmp.le.s32.totalorder 1, %s15
      %p215 = scmp.lt.s32.totalorder %s15, 3
      %p216 = pnand %p214, %p215
      %p217 = pneg %p216
      // Predicated region
      $region41: #{tpu_custom_call.1} parent=5 // pred_check
        _
      $region42: #{tpu_custom_call.1} parent=5 // pred_check_branch
        %219 = sbr.rel (%p216) target = $region44
      $region43: #{tpu_custom_call.1} parent=5 // pred_region
        %s220 = ssub.s32 %s15, 1
        %p221 = scmp.lt.s32.totalorder %s20, 1
        %s222 = scalar_select %p221, %s20, 1
        %s223 = smul.addr %s222, 8
        %s224 = smul.addr %s223, 8
        %s225 = scalar_lea.vmem %s0, %s224
        %p226 = pneg %p41
        %p227 = pneg %p38
        %p228 = pneg %p62
        %p229 = pneg %p59
        %p230 = pneg %p83
        %p231 = pneg %p80
        %p232 = pneg %p104
        %p233 = pneg %p101
        %p234 = pneg %p125
        %p235 = pneg %p122
        %p236 = pneg %p146
        %p237 = pneg %p143
        %p238 = pneg %p172
        %p239 = pneg %p169
        %s240 = sand.u32 %s159, 1
        %s241 = scalar_lea.sflag [#allocation3], %s240
        %s242 = sand.u32 %s159, 1
        %s243 = smul.addr %s242, 384
        %s244 = scalar_lea.vmem [#allocation2], %s243
        %p245 = scmp.lt.s32.totalorder %s20, 1
        %s246 = scalar_select %p245, %s20, 1
        %s247 = smul.addr %s246, 8
        %s248 = smul.addr %s247, 8
        %s249 = scalar_lea.vmem %s0, %s248
        %v250 = vld [vmem:[%s249] sm:$0xff]
        %v251 = vld [vmem:[%s249 + $0x8] sm:$0xff]
        %v252 = vld [vmem:[%s249 + $0x10] sm:$0xff]
        %v253 = vld [vmem:[%s249 + $0x18] sm:$0xff]
        %v254 = vld [vmem:[%s249 + $0x20] sm:$0xff]
        %v255 = vld [vmem:[%s249 + $0x28] sm:$0xff]
        %v256 = vld [vmem:[%s249 + $0x30] sm:$0xff]
        %v257 = vld [vmem:[%s249 + $0x38] sm:$0xff]
        %v258 = vld [vmem:[%s1] sm:$0xff]
        %v259 = vld [vmem:[%s1 + $0x8] sm:$0xff]
        %v260 = vld [vmem:[%s1 + $0x10] sm:$0xff]
        %v261 = vld [vmem:[%s1 + $0x18] sm:$0xff]
        %v262 = vld [vmem:[%s1 + $0x20] sm:$0xff]
        %v263 = vld [vmem:[%s1 + $0x28] sm:$0xff]
        %v264 = vld [vmem:[%s1 + $0x30] sm:$0xff]
        %v265 = vld [vmem:[%s1 + $0x38] sm:$0xff]
        %v266 = vld [vmem:[%s1 + $0x40] sm:$0xff]
        %v267 = vld [vmem:[%s1 + $0x48] sm:$0xff]
        %v268 = vld [vmem:[%s1 + $0x50] sm:$0xff]
        %v269 = vld [vmem:[%s1 + $0x58] sm:$0xff]
        %v270 = vld [vmem:[%s1 + $0x60] sm:$0xff]
        %v271 = vld [vmem:[%s1 + $0x68] sm:$0xff]
        %v272 = vld [vmem:[%s1 + $0x70] sm:$0xff]
        %v273 = vld [vmem:[%s1 + $0x78] sm:$0xff]
        %v274 = vld [vmem:[%s1 + $0x80] sm:$0xff]
        %v275 = vld [vmem:[%s1 + $0x88] sm:$0xff]
        %v276 = vld [vmem:[%s1 + $0x90] sm:$0xff]
        %v277 = vld [vmem:[%s1 + $0x98] sm:$0xff]
        %v278 = vld [vmem:[%s1 + $0xa0] sm:$0xff]
        %v279 = vld [vmem:[%s1 + $0xa8] sm:$0xff]
        %v280 = vld [vmem:[%s1 + $0xb0] sm:$0xff]
        %v281 = vld [vmem:[%s1 + $0xb8] sm:$0xff]
        %v282 = vld [vmem:[%s1 + $0xc0] sm:$0xff]
        %v283 = vld [vmem:[%s1 + $0xc8] sm:$0xff]
        %v284 = vld [vmem:[%s1 + $0xd0] sm:$0xff]
        %v285 = vld [vmem:[%s1 + $0xd8] sm:$0xff]
        %v286 = vld [vmem:[%s1 + $0xe0] sm:$0xff]
        %v287 = vld [vmem:[%s1 + $0xe8] sm:$0xff]
        %v288 = vld [vmem:[%s1 + $0xf0] sm:$0xff]
        %v289 = vld [vmem:[%s1 + $0xf8] sm:$0xff]
        %290 = vmatpush.msra.mxu0 %v273
        %291 = vmatpush.msra.mxu0 %v272
        %292 = vmatpush.msra.mxu0 %v271
        %293 = vmatpush.msra.mxu0 %v270
        %294 = vmatpush.msra.mxu0 %v269
        %295 = vmatpush.msra.mxu0 %v268
        %296 = vmatpush.msra.mxu0 %v267
        %297 = vmatpush.msra.mxu0 %v266
        %298 = vmatpush.msra.mxu0 %v265
        %299 = vmatpush.msra.mxu0 %v264
        %300 = vmatpush.msra.mxu0 %v263
        %301 = vmatpush.msra.mxu0 %v262
        %302 = vmatpush.msra.mxu0 %v261
        %303 = vmatpush.msra.mxu0 %v260
        %304 = vmatpush.msra.mxu0 %v259
        %305 = vmatpush.msra.mxu0 %v258
        %306 = vmatmul.f32.gmra.mxu0 %v250
        %v307 = vpop.f32.mrf.mxu0
        %v308 = vadd.f32 0.0, %v307
        %309 = vmatmul.f32.gmra.mxu0 %v252
        %v310 = vpop.f32.mrf.mxu0
        %v311 = vadd.f32 0.0, %v310
        %312 = vmatmul.f32.gmra.mxu0 %v254
        %v313 = vpop.f32.mrf.mxu0
        %v314 = vadd.f32 0.0, %v313
        %315 = vmatmul.f32.gmra.mxu0 %v256
        %v316 = vpop.f32.mrf.mxu0
        %v317 = vadd.f32 0.0, %v316
        %318 = vdwg.mxu0
        %319 = vmatpush.msra.mxu0 %v289
        %320 = vmatpush.msra.mxu0 %v288
        %321 = vmatpush.msra.mxu0 %v287
        %322 = vmatpush.msra.mxu0 %v286
        %323 = vmatpush.msra.mxu0 %v285
        %324 = vmatpush.msra.mxu0 %v284
        %325 = vmatpush.msra.mxu0 %v283
        %326 = vmatpush.msra.mxu0 %v282
        %327 = vmatpush.msra.mxu0 %v281
        %328 = vmatpush.msra.mxu0 %v280
        %329 = vmatpush.msra.mxu0 %v279
        %330 = vmatpush.msra.mxu0 %v278
        %331 = vmatpush.msra.mxu0 %v277
        %332 = vmatpush.msra.mxu0 %v276
        %333 = vmatpush.msra.mxu0 %v275
        %334 = vmatpush.msra.mxu0 %v274
        %335 = vmatmul.f32.gmra.mxu0 %v251
        %v336 = vpop.f32.mrf.mxu0
        %v337 = vadd.f32 %v308, %v336
        %338 = vmatmul.f32.gmra.mxu0 %v253
        %v339 = vpop.f32.mrf.mxu0
        %v340 = vadd.f32 %v311, %v339
        %341 = vmatmul.f32.gmra.mxu0 %v255
        %v342 = vpop.f32.mrf.mxu0
        %v343 = vadd.f32 %v314, %v342
        %344 = vmatmul.f32.gmra.mxu0 %v257
        %v345 = vpop.f32.mrf.mxu0
        %v346 = vadd.f32 %v317, %v345
        %347 = vdwg.mxu0
        %v348 = vld [vmem:[%s2] sm:$0xff]
        %v349 = vld [vmem:[%s2 + $0x8] sm:$0xff]
        %v350 = vld [vmem:[%s2 + $0x10] sm:$0xff]
        %v351 = vld [vmem:[%s2 + $0x18] sm:$0xff]
        %v352 = vld [vmem:[%s2 + $0x20] sm:$0xff]
        %v353 = vld [vmem:[%s2 + $0x28] sm:$0xff]
        %v354 = vld [vmem:[%s2 + $0x30] sm:$0xff]
        %v355 = vld [vmem:[%s2 + $0x38] sm:$0xff]
        %v356 = vld [vmem:[%s2 + $0x40] sm:$0xff]
        %v357 = vld [vmem:[%s2 + $0x48] sm:$0xff]
        %v358 = vld [vmem:[%s2 + $0x50] sm:$0xff]
        %v359 = vld [vmem:[%s2 + $0x58] sm:$0xff]
        %v360 = vld [vmem:[%s2 + $0x60] sm:$0xff]
        %v361 = vld [vmem:[%s2 + $0x68] sm:$0xff]
        %v362 = vld [vmem:[%s2 + $0x70] sm:$0xff]
        %v363 = vld [vmem:[%s2 + $0x78] sm:$0xff]
        %v364 = vld [vmem:[%s2 + $0x80] sm:$0xff]
        %v365 = vld [vmem:[%s2 + $0x88] sm:$0xff]
        %v366 = vld [vmem:[%s2 + $0x90] sm:$0xff]
        %v367 = vld [vmem:[%s2 + $0x98] sm:$0xff]
        %v368 = vld [vmem:[%s2 + $0xa0] sm:$0xff]
        %v369 = vld [vmem:[%s2 + $0xa8] sm:$0xff]
        %v370 = vld [vmem:[%s2 + $0xb0] sm:$0xff]
        %v371 = vld [vmem:[%s2 + $0xb8] sm:$0xff]
        %v372 = vld [vmem:[%s3] sm:$0xff]
        %v373 = vld [vmem:[%s3 + $0x8] sm:$0xff]
        %v374 = vld [vmem:[%s3 + $0x10] sm:$0xff]
        %v375 = vld [vmem:[%s3 + $0x18] sm:$0xff]
        %v376 = vld [vmem:[%s3 + $0x20] sm:$0xff]
        %v377 = vld [vmem:[%s3 + $0x28] sm:$0xff]
        %v378 = vld [vmem:[%s3 + $0x30] sm:$0xff]
        %v379 = vld [vmem:[%s3 + $0x38] sm:$0xff]
        %v380 = vld [vmem:[%s3 + $0x40] sm:$0xff]
        %v381 = vld [vmem:[%s3 + $0x48] sm:$0xff]
        %v382 = vld [vmem:[%s3 + $0x50] sm:$0xff]
        %v383 = vld [vmem:[%s3 + $0x58] sm:$0xff]
        %v384 = vld [vmem:[%s3 + $0x60] sm:$0xff]
        %v385 = vld [vmem:[%s3 + $0x68] sm:$0xff]
        %v386 = vld [vmem:[%s3 + $0x70] sm:$0xff]
        %v387 = vld [vmem:[%s3 + $0x78] sm:$0xff]
        %v388 = vld [vmem:[%s3 + $0x80] sm:$0xff]
        %v389 = vld [vmem:[%s3 + $0x88] sm:$0xff]
        %v390 = vld [vmem:[%s3 + $0x90] sm:$0xff]
        %v391 = vld [vmem:[%s3 + $0x98] sm:$0xff]
        %v392 = vld [vmem:[%s3 + $0xa0] sm:$0xff]
        %v393 = vld [vmem:[%s3 + $0xa8] sm:$0xff]
        %v394 = vld [vmem:[%s3 + $0xb0] sm:$0xff]
        %v395 = vld [vmem:[%s3 + $0xb8] sm:$0xff]
        %397 = vset.pattern.permute.xlu0 0
        %398 = vperm.xlu0 %397, %v372
        %v399 = vpop.permute.xlu0 %398
        %402 = vset.pattern.permute.xlu0 0
        %403 = vperm.xlu0 %402, %v373
        %v404 = vpop.permute.xlu0 %403
        %407 = vset.pattern.permute.xlu0 0
        %408 = vperm.xlu0 %407, %v374
        %v409 = vpop.permute.xlu0 %408
        %412 = vset.pattern.permute.xlu0 0
        %413 = vperm.xlu0 %412, %v375
        %v414 = vpop.permute.xlu0 %413
        %417 = vset.pattern.permute.xlu0 0
        %418 = vperm.xlu0 %417, %v376
        %v419 = vpop.permute.xlu0 %418
        %422 = vset.pattern.permute.xlu0 0
        %423 = vperm.xlu0 %422, %v377
        %v424 = vpop.permute.xlu0 %423
        %427 = vset.pattern.permute.xlu0 0
        %428 = vperm.xlu0 %427, %v378
        %v429 = vpop.permute.xlu0 %428
        %432 = vset.pattern.permute.xlu0 0
        %433 = vperm.xlu0 %432, %v379
        %v434 = vpop.permute.xlu0 %433
        %437 = vset.pattern.permute.xlu0 0
        %438 = vperm.xlu0 %437, %v380
        %v439 = vpop.permute.xlu0 %438
        %442 = vset.pattern.permute.xlu0 0
        %443 = vperm.xlu0 %442, %v381
        %v444 = vpop.permute.xlu0 %443
        %447 = vset.pattern.permute.xlu0 0
        %448 = vperm.xlu0 %447, %v382
        %v449 = vpop.permute.xlu0 %448
        %452 = vset.pattern.permute.xlu0 0
        %453 = vperm.xlu0 %452, %v383
        %v454 = vpop.permute.xlu0 %453
        %457 = vset.pattern.permute.xlu0 0
        %458 = vperm.xlu0 %457, %v384
        %v459 = vpop.permute.xlu0 %458
        %462 = vset.pattern.permute.xlu0 0
        %463 = vperm.xlu0 %462, %v385
        %v464 = vpop.permute.xlu0 %463
        %467 = vset.pattern.permute.xlu0 0
        %468 = vperm.xlu0 %467, %v386
        %v469 = vpop.permute.xlu0 %468
        %472 = vset.pattern.permute.xlu0 0
        %473 = vperm.xlu0 %472, %v387
        %v474 = vpop.permute.xlu0 %473
        %477 = vset.pattern.permute.xlu0 0
        %478 = vperm.xlu0 %477, %v388
        %v479 = vpop.permute.xlu0 %478
        %482 = vset.pattern.permute.xlu0 0
        %483 = vperm.xlu0 %482, %v389
        %v484 = vpop.permute.xlu0 %483
        %487 = vset.pattern.permute.xlu0 0
        %488 = vperm.xlu0 %487, %v390
        %v489 = vpop.permute.xlu0 %488
        %492 = vset.pattern.permute.xlu0 0
        %493 = vperm.xlu0 %492, %v391
        %v494 = vpop.permute.xlu0 %493
        %497 = vset.pattern.permute.xlu0 0
        %498 = vperm.xlu0 %497, %v392
        %v499 = vpop.permute.xlu0 %498
        %502 = vset.pattern.permute.xlu0 0
        %503 = vperm.xlu0 %502, %v393
        %v504 = vpop.permute.xlu0 %503
        %507 = vset.pattern.permute.xlu0 0
        %508 = vperm.xlu0 %507, %v394
        %v509 = vpop.permute.xlu0 %508
        %512 = vset.pattern.permute.xlu0 0
        %513 = vperm.xlu0 %512, %v395
        %v514 = vpop.permute.xlu0 %513
        %vm516 = vcmask 261120
        %v518 = vsel %vm516, %v348, 0
        %v521 = vsel %vm516, %v349, 0
        %v524 = vsel %vm516, %v350, 0
        %v527 = vsel %vm516, %v351, 0
        %v530 = vsel %vm516, %v352, 0
        %v533 = vsel %vm516, %v353, 0
        %v536 = vsel %vm516, %v354, 0
        %v539 = vsel %vm516, %v355, 0
        %v542 = vsel %vm516, %v356, 0
        %v545 = vsel %vm516, %v357, 0
        %v548 = vsel %vm516, %v358, 0
        %v551 = vsel %vm516, %v359, 0
        %v554 = vsel %vm516, %v360, 0
        %v557 = vsel %vm516, %v361, 0
        %v560 = vsel %vm516, %v362, 0
        %v563 = vsel %vm516, %v363, 0
        %v566 = vsel %vm516, %v364, 0
        %v569 = vsel %vm516, %v365, 0
        %v572 = vsel %vm516, %v366, 0
        %v575 = vsel %vm516, %v367, 0
        %v578 = vsel %vm516, %v368, 0
        %v581 = vsel %vm516, %v369, 0
        %v584 = vsel %vm516, %v370, 0
        %v587 = vsel %vm516, %v371, 0
        %589 = vmatpush.msra.mxu0 0.0
        %590 = vmatpush.msra.mxu0 0.0
        %591 = vmatpush.msra.mxu0 0.0
        %592 = vmatpush.msra.mxu0 0.0
        %593 = vmatpush.msra.mxu0 0.0
        %594 = vmatpush.msra.mxu0 0.0
        %595 = vmatpush.msra.mxu0 0.0
        %596 = vmatpush.msra.mxu0 0.0
        %597 = vmatpush.msra.mxu0 0.0
        %598 = vmatpush.msra.mxu0 0.0
        %599 = vmatpush.msra.mxu0 0.0
        %600 = vmatpush.msra.mxu0 0.0
        %601 = vmatpush.msra.mxu0 %v346
        %602 = vmatpush.msra.mxu0 %v343
        %603 = vmatpush.msra.mxu0 %v340
        %604 = vmatpush.msra.mxu0 %v337
        %605 = vmatmul.f32.gmra.mxu0 %v518
        %v606 = vpop.f32.mrf.mxu0
        %v607 = vadd.f32 %v399, %v606
        %608 = vmatmul.f32.gmra.mxu0 %v521
        %v609 = vpop.f32.mrf.mxu0
        %v610 = vadd.f32 %v404, %v609
        %611 = vmatmul.f32.gmra.mxu0 %v524
        %v612 = vpop.f32.mrf.mxu0
        %v613 = vadd.f32 %v409, %v612
        %614 = vmatmul.f32.gmra.mxu0 %v527
        %v615 = vpop.f32.mrf.mxu0
        %v616 = vadd.f32 %v414, %v615
        %617 = vmatmul.f32.gmra.mxu0 %v530
        %v618 = vpop.f32.mrf.mxu0
        %v619 = vadd.f32 %v419, %v618
        %620 = vmatmul.f32.gmra.mxu0 %v533
        %v621 = vpop.f32.mrf.mxu0
        %v622 = vadd.f32 %v424, %v621
        %623 = vmatmul.f32.gmra.mxu0 %v536
        %v624 = vpop.f32.mrf.mxu0
        %v625 = vadd.f32 %v429, %v624
        %626 = vmatmul.f32.gmra.mxu0 %v539
        %v627 = vpop.f32.mrf.mxu0
        %v628 = vadd.f32 %v434, %v627
        %629 = vmatmul.f32.gmra.mxu0 %v542
        %v630 = vpop.f32.mrf.mxu0
        %v631 = vadd.f32 %v439, %v630
        %632 = vmatmul.f32.gmra.mxu0 %v545
        %v633 = vpop.f32.mrf.mxu0
        %v634 = vadd.f32 %v444, %v633
        %635 = vmatmul.f32.gmra.mxu0 %v548
        %v636 = vpop.f32.mrf.mxu0
        %v637 = vadd.f32 %v449, %v636
        %638 = vmatmul.f32.gmra.mxu0 %v551
        %v639 = vpop.f32.mrf.mxu0
        %v640 = vadd.f32 %v454, %v639
        %641 = vmatmul.f32.gmra.mxu0 %v554
        %v642 = vpop.f32.mrf.mxu0
        %v643 = vadd.f32 %v459, %v642
        %644 = vmatmul.f32.gmra.mxu0 %v557
        %v645 = vpop.f32.mrf.mxu0
        %v646 = vadd.f32 %v464, %v645
        %647 = vmatmul.f32.gmra.mxu0 %v560
        %v648 = vpop.f32.mrf.mxu0
        %v649 = vadd.f32 %v469, %v648
        %650 = vmatmul.f32.gmra.mxu0 %v563
        %v651 = vpop.f32.mrf.mxu0
        %v652 = vadd.f32 %v474, %v651
        %653 = vmatmul.f32.gmra.mxu0 %v566
        %v654 = vpop.f32.mrf.mxu0
        %v655 = vadd.f32 %v479, %v654
        %656 = vmatmul.f32.gmra.mxu0 %v569
        %v657 = vpop.f32.mrf.mxu0
        %v658 = vadd.f32 %v484, %v657
        %659 = vmatmul.f32.gmra.mxu0 %v572
        %v660 = vpop.f32.mrf.mxu0
        %v661 = vadd.f32 %v489, %v660
        %662 = vmatmul.f32.gmra.mxu0 %v575
        %v663 = vpop.f32.mrf.mxu0
        %v664 = vadd.f32 %v494, %v663
        %665 = vmatmul.f32.gmra.mxu0 %v578
        %v666 = vpop.f32.mrf.mxu0
        %v667 = vadd.f32 %v499, %v666
        %668 = vmatmul.f32.gmra.mxu0 %v581
        %v669 = vpop.f32.mrf.mxu0
        %v670 = vadd.f32 %v504, %v669
        %671 = vmatmul.f32.gmra.mxu0 %v584
        %v672 = vpop.f32.mrf.mxu0
        %v673 = vadd.f32 %v509, %v672
        %674 = vmatmul.f32.gmra.mxu0 %v587
        %v675 = vpop.f32.mrf.mxu0
        %v676 = vadd.f32 %v514, %v675
        %677 = vdwg.mxu0
        %v678 = vmax.f32 %v607, 0.0
        %v679 = vmax.f32 %v610, 0.0
        %v680 = vmax.f32 %v613, 0.0
        %v681 = vmax.f32 %v616, 0.0
        %v682 = vmax.f32 %v619, 0.0
        %v683 = vmax.f32 %v622, 0.0
        %v684 = vmax.f32 %v625, 0.0
        %v685 = vmax.f32 %v628, 0.0
        %v686 = vmax.f32 %v631, 0.0
        %v687 = vmax.f32 %v634, 0.0
        %v688 = vmax.f32 %v637, 0.0
        %v689 = vmax.f32 %v640, 0.0
        %v690 = vmax.f32 %v643, 0.0
        %v691 = vmax.f32 %v646, 0.0
        %v692 = vmax.f32 %v649, 0.0
        %v693 = vmax.f32 %v652, 0.0
        %v694 = vmax.f32 %v655, 0.0
        %v695 = vmax.f32 %v658, 0.0
        %v696 = vmax.f32 %v661, 0.0
        %v697 = vmax.f32 %v664, 0.0
        %v698 = vmax.f32 %v667, 0.0
        %v699 = vmax.f32 %v670, 0.0
        %v700 = vmax.f32 %v673, 0.0
        %v701 = vmax.f32 %v676, 0.0
        %v702 = vld [vmem:[%s4] sm:$0xff]
        %v703 = vld [vmem:[%s4 + $0x8] sm:$0xff]
        %v704 = vld [vmem:[%s4 + $0x10] sm:$0xff]
        %v705 = vld [vmem:[%s4 + $0x18] sm:$0xff]
        %v706 = vld [vmem:[%s4 + $0x20] sm:$0xff]
        %v707 = vld [vmem:[%s4 + $0x28] sm:$0xff]
        %v708 = vld [vmem:[%s4 + $0x30] sm:$0xff]
        %v709 = vld [vmem:[%s4 + $0x38] sm:$0xff]
        %v710 = vld [vmem:[%s4 + $0x40] sm:$0xff]
        %v711 = vld [vmem:[%s4 + $0x48] sm:$0xff]
        %v712 = vld [vmem:[%s4 + $0x50] sm:$0xff]
        %v713 = vld [vmem:[%s4 + $0x58] sm:$0xff]
        %v714 = vld [vmem:[%s4 + $0x60] sm:$0xff]
        %v715 = vld [vmem:[%s4 + $0x68] sm:$0xff]
        %v716 = vld [vmem:[%s4 + $0x70] sm:$0xff]
        %v717 = vld [vmem:[%s4 + $0x78] sm:$0xff]
        %v718 = vld [vmem:[%s4 + $0x80] sm:$0xff]
        %v719 = vld [vmem:[%s4 + $0x88] sm:$0xff]
        %v720 = vld [vmem:[%s4 + $0x90] sm:$0xff]
        %v721 = vld [vmem:[%s4 + $0x98] sm:$0xff]
        %v722 = vld [vmem:[%s4 + $0xa0] sm:$0xff]
        %v723 = vld [vmem:[%s4 + $0xa8] sm:$0xff]
        %v724 = vld [vmem:[%s4 + $0xb0] sm:$0xff]
        %v725 = vld [vmem:[%s4 + $0xb8] sm:$0xff]
        %v726 = vmul.f32 %v678, %v702
        %v727 = vmul.f32 %v679, %v703
        %v728 = vmul.f32 %v680, %v704
        %v729 = vmul.f32 %v681, %v705
        %v730 = vmul.f32 %v682, %v706
        %v731 = vmul.f32 %v683, %v707
        %v732 = vmul.f32 %v684, %v708
        %v733 = vmul.f32 %v685, %v709
        %v734 = vmul.f32 %v686, %v710
        %v735 = vmul.f32 %v687, %v711
        %v736 = vmul.f32 %v688, %v712
        %v737 = vmul.f32 %v689, %v713
        %v738 = vmul.f32 %v690, %v714
        %v739 = vmul.f32 %v691, %v715
        %v740 = vmul.f32 %v692, %v716
        %v741 = vmul.f32 %v693, %v717
        %v742 = vmul.f32 %v694, %v718
        %v743 = vmul.f32 %v695, %v719
        %v744 = vmul.f32 %v696, %v720
        %v745 = vmul.f32 %v697, %v721
        %v746 = vmul.f32 %v698, %v722
        %v747 = vmul.f32 %v699, %v723
        %v748 = vmul.f32 %v700, %v724
        %v749 = vmul.f32 %v701, %v725
        %v750 = vld [vmem:[%s5] sm:$0xff]
        %v751 = vld [vmem:[%s5 + $0x8] sm:$0xff]
        %v752 = vld [vmem:[%s5 + $0x10] sm:$0xff]
        %v753 = vld [vmem:[%s5 + $0x18] sm:$0xff]
        %v754 = vld [vmem:[%s5 + $0x20] sm:$0x1f]
        %v755 = vld [vmem:[%s5 + $0x28] sm:$0x1f]
        %vm756 = vcmask 171008
        %v758 = vsel %vm756, %v726, 0
        %v761 = vsel %vm756, %v727, 0
        %v764 = vsel %vm756, %v728, 0
        %v767 = vsel %vm756, %v729, 0
        %v770 = vsel %vm756, %v730, 0
        %v773 = vsel %vm756, %v731, 0
        %v776 = vsel %vm756, %v732, 0
        %v779 = vsel %vm756, %v733, 0
        %v782 = vsel %vm756, %v734, 0
        %v785 = vsel %vm756, %v735, 0
        %v788 = vsel %vm756, %v736, 0
        %v791 = vsel %vm756, %v737, 0
        %v794 = vsel %vm756, %v738, 0
        %v797 = vsel %vm756, %v739, 0
        %v800 = vsel %vm756, %v740, 0
        %v803 = vsel %vm756, %v741, 0
        %v806 = vsel %vm756, %v742, 0
        %v809 = vsel %vm756, %v743, 0
        %v812 = vsel %vm756, %v744, 0
        %v815 = vsel %vm756, %v745, 0
        %v818 = vsel %vm756, %v746, 0
        %v821 = vsel %vm756, %v747, 0
        %v824 = vsel %vm756, %v748, 0
        %v827 = vsel %vm756, %v749, 0
        %vm829 = vcmask 1044480
        %v831 = vsel %vm829, %v754, 0
        %v834 = vsel %vm829, %v755, 0
        %836 = vmatpush.msra.mxu0 0.0
        %837 = vmatpush.msra.mxu0 0.0
        %838 = vmatpush.msra.mxu0 0.0
        %839 = vmatpush.msra.mxu0 0.0
        %840 = vmatpush.msra.mxu0 0.0
        %841 = vmatpush.msra.mxu0 0.0
        %842 = vmatpush.msra.mxu0 0.0
        %843 = vmatpush.msra.mxu0 0.0
        %844 = vmatpush.msra.mxu0 0.0
        %845 = vmatpush.msra.mxu0 0.0
        %846 = vmatpush.msra.mxu0 0.0
        %847 = vmatpush.msra.mxu0 0.0
        %848 = vmatpush.msra.mxu0 0.0
        %849 = vmatpush.msra.mxu0 %v831
        %850 = vmatpush.msra.mxu0 %v752
        %851 = vmatpush.msra.mxu0 %v750
        %852 = vmatmul.f32.gmra.mxu0 %v758
        %v853 = vpop.f32.mrf.mxu0
        %v854 = vadd.f32 0.0, %v853
        %855 = vmatmul.f32.gmra.mxu0 %v761
        %v856 = vpop.f32.mrf.mxu0
        %v857 = vadd.f32 0.0, %v856
        %858 = vmatmul.f32.gmra.mxu0 %v764
        %v859 = vpop.f32.mrf.mxu0
        %v860 = vadd.f32 0.0, %v859
        %861 = vmatmul.f32.gmra.mxu0 %v767
        %v862 = vpop.f32.mrf.mxu0
        %v863 = vadd.f32 0.0, %v862
        %864 = vmatmul.f32.gmra.mxu0 %v770
        %v865 = vpop.f32.mrf.mxu0
        %v866 = vadd.f32 0.0, %v865
        %867 = vmatmul.f32.gmra.mxu0 %v773
        %v868 = vpop.f32.mrf.mxu0
        %v869 = vadd.f32 0.0, %v868
        %870 = vmatmul.f32.gmra.mxu0 %v776
        %v871 = vpop.f32.mrf.mxu0
        %v872 = vadd.f32 0.0, %v871
        %873 = vmatmul.f32.gmra.mxu0 %v779
        %v874 = vpop.f32.mrf.mxu0
        %v875 = vadd.f32 0.0, %v874
        %876 = vmatmul.f32.gmra.mxu0 %v782
        %v877 = vpop.f32.mrf.mxu0
        %v878 = vadd.f32 0.0, %v877
        %879 = vmatmul.f32.gmra.mxu0 %v785
        %v880 = vpop.f32.mrf.mxu0
        %v881 = vadd.f32 0.0, %v880
        %882 = vmatmul.f32.gmra.mxu0 %v788
        %v883 = vpop.f32.mrf.mxu0
        %v884 = vadd.f32 0.0, %v883
        %885 = vmatmul.f32.gmra.mxu0 %v791
        %v886 = vpop.f32.mrf.mxu0
        %v887 = vadd.f32 0.0, %v886
        %888 = vmatmul.f32.gmra.mxu0 %v794
        %v889 = vpop.f32.mrf.mxu0
        %v890 = vadd.f32 0.0, %v889
        %891 = vmatmul.f32.gmra.mxu0 %v797
        %v892 = vpop.f32.mrf.mxu0
        %v893 = vadd.f32 0.0, %v892
        %894 = vmatmul.f32.gmra.mxu0 %v800
        %v895 = vpop.f32.mrf.mxu0
        %v896 = vadd.f32 0.0, %v895
        %897 = vmatmul.f32.gmra.mxu0 %v803
        %v898 = vpop.f32.mrf.mxu0
        %v899 = vadd.f32 0.0, %v898
        %900 = vmatmul.f32.gmra.mxu0 %v806
        %v901 = vpop.f32.mrf.mxu0
        %v902 = vadd.f32 0.0, %v901
        %903 = vmatmul.f32.gmra.mxu0 %v809
        %v904 = vpop.f32.mrf.mxu0
        %v905 = vadd.f32 0.0, %v904
        %906 = vmatmul.f32.gmra.mxu0 %v812
        %v907 = vpop.f32.mrf.mxu0
        %v908 = vadd.f32 0.0, %v907
        %909 = vmatmul.f32.gmra.mxu0 %v815
        %v910 = vpop.f32.mrf.mxu0
        %v911 = vadd.f32 0.0, %v910
        %912 = vmatmul.f32.gmra.mxu0 %v818
        %v913 = vpop.f32.mrf.mxu0
        %v914 = vadd.f32 0.0, %v913
        %915 = vmatmul.f32.gmra.mxu0 %v821
        %v916 = vpop.f32.mrf.mxu0
        %v917 = vadd.f32 0.0, %v916
        %918 = vmatmul.f32.gmra.mxu0 %v824
        %v919 = vpop.f32.mrf.mxu0
        %v920 = vadd.f32 0.0, %v919
        %921 = vmatmul.f32.gmra.mxu0 %v827
        %v922 = vpop.f32.mrf.mxu0
        %v923 = vadd.f32 0.0, %v922
        %924 = vdwg.mxu0
        %925 = vmatpush.msra.mxu0 0.0
        %926 = vmatpush.msra.mxu0 0.0
        %927 = vmatpush.msra.mxu0 0.0
        %928 = vmatpush.msra.mxu0 0.0
        %929 = vmatpush.msra.mxu0 0.0
        %930 = vmatpush.msra.mxu0 0.0
        %931 = vmatpush.msra.mxu0 0.0
        %932 = vmatpush.msra.mxu0 0.0
        %933 = vmatpush.msra.mxu0 0.0
        %934 = vmatpush.msra.mxu0 0.0
        %935 = vmatpush.msra.mxu0 0.0
        %936 = vmatpush.msra.mxu0 0.0
        %937 = vmatpush.msra.mxu0 0.0
        %938 = vmatpush.msra.mxu0 %v834
        %939 = vmatpush.msra.mxu0 %v753
        %940 = vmatpush.msra.mxu0 %v751
        %941 = vmatmul.f32.gmra.mxu0 %v758
        %v942 = vpop.f32.mrf.mxu0
        %v943 = vadd.f32 0.0, %v942
        %944 = vmatmul.f32.gmra.mxu0 %v761
        %v945 = vpop.f32.mrf.mxu0
        %v946 = vadd.f32 0.0, %v945
        %947 = vmatmul.f32.gmra.mxu0 %v764
        %v948 = vpop.f32.mrf.mxu0
        %v949 = vadd.f32 0.0, %v948
        %950 = vmatmul.f32.gmra.mxu0 %v767
        %v951 = vpop.f32.mrf.mxu0
        %v952 = vadd.f32 0.0, %v951
        %953 = vmatmul.f32.gmra.mxu0 %v770
        %v954 = vpop.f32.mrf.mxu0
        %v955 = vadd.f32 0.0, %v954
        %956 = vmatmul.f32.gmra.mxu0 %v773
        %v957 = vpop.f32.mrf.mxu0
        %v958 = vadd.f32 0.0, %v957
        %959 = vmatmul.f32.gmra.mxu0 %v776
        %v960 = vpop.f32.mrf.mxu0
        %v961 = vadd.f32 0.0, %v960
        %962 = vmatmul.f32.gmra.mxu0 %v779
        %v963 = vpop.f32.mrf.mxu0
        %v964 = vadd.f32 0.0, %v963
        %965 = vmatmul.f32.gmra.mxu0 %v782
        %v966 = vpop.f32.mrf.mxu0
        %v967 = vadd.f32 0.0, %v966
        %968 = vmatmul.f32.gmra.mxu0 %v785
        %v969 = vpop.f32.mrf.mxu0
        %v970 = vadd.f32 0.0, %v969
        %971 = vmatmul.f32.gmra.mxu0 %v788
        %v972 = vpop.f32.mrf.mxu0
        %v973 = vadd.f32 0.0, %v972
        %974 = vmatmul.f32.gmra.mxu0 %v791
        %v975 = vpop.f32.mrf.mxu0
        %v976 = vadd.f32 0.0, %v975
        %977 = vmatmul.f32.gmra.mxu0 %v794
        %v978 = vpop.f32.mrf.mxu0
        %v979 = vadd.f32 0.0, %v978
        %980 = vmatmul.f32.gmra.mxu0 %v797
        %v981 = vpop.f32.mrf.mxu0
        %v982 = vadd.f32 0.0, %v981
        %983 = vmatmul.f32.gmra.mxu0 %v800
        %v984 = vpop.f32.mrf.mxu0
        %v985 = vadd.f32 0.0, %v984
        %986 = vmatmul.f32.gmra.mxu0 %v803
        %v987 = vpop.f32.mrf.mxu0
        %v988 = vadd.f32 0.0, %v987
        %989 = vmatmul.f32.gmra.mxu0 %v806
        %v990 = vpop.f32.mrf.mxu0
        %v991 = vadd.f32 0.0, %v990
        %992 = vmatmul.f32.gmra.mxu0 %v809
        %v993 = vpop.f32.mrf.mxu0
        %v994 = vadd.f32 0.0, %v993
        %995 = vmatmul.f32.gmra.mxu0 %v812
        %v996 = vpop.f32.mrf.mxu0
        %v997 = vadd.f32 0.0, %v996
        %998 = vmatmul.f32.gmra.mxu0 %v815
        %v999 = vpop.f32.mrf.mxu0
        %v1000 = vadd.f32 0.0, %v999
        %1001 = vmatmul.f32.gmra.mxu0 %v818
        %v1002 = vpop.f32.mrf.mxu0
        %v1003 = vadd.f32 0.0, %v1002
        %1004 = vmatmul.f32.gmra.mxu0 %v821
        %v1005 = vpop.f32.mrf.mxu0
        %v1006 = vadd.f32 0.0, %v1005
        %1007 = vmatmul.f32.gmra.mxu0 %v824
        %v1008 = vpop.f32.mrf.mxu0
        %v1009 = vadd.f32 0.0, %v1008
        %1010 = vmatmul.f32.gmra.mxu0 %v827
        %v1011 = vpop.f32.mrf.mxu0
        %v1012 = vadd.f32 0.0, %v1011
        %1013 = vdwg.mxu0
        %1014 = vst [vmem:[%s244] sm:$0xff] %v854
        %1015 = vst [vmem:[%s244 + $0x8] sm:$0xff] %v943
        %1016 = vst [vmem:[%s244 + $0x10] sm:$0xff] %v857
        %1017 = vst [vmem:[%s244 + $0x18] sm:$0xff] %v946
        %1018 = vst [vmem:[%s244 + $0x20] sm:$0xff] %v860
        %1019 = vst [vmem:[%s244 + $0x28] sm:$0xff] %v949
        %1020 = vst [vmem:[%s244 + $0x30] sm:$0xff] %v863
        %1021 = vst [vmem:[%s244 + $0x38] sm:$0xff] %v952
        %1022 = vst [vmem:[%s244 + $0x40] sm:$0xff] %v866
        %1023 = vst [vmem:[%s244 + $0x48] sm:$0xff] %v955
        %1024 = vst [vmem:[%s244 + $0x50] sm:$0xff] %v869
        %1025 = vst [vmem:[%s244 + $0x58] sm:$0xff] %v958
        %1026 = vst [vmem:[%s244 + $0x60] sm:$0xff] %v872
        %1027 = vst [vmem:[%s244 + $0x68] sm:$0xff] %v961
        %1028 = vst [vmem:[%s244 + $0x70] sm:$0xff] %v875
        %1029 = vst [vmem:[%s244 + $0x78] sm:$0xff] %v964
        %1030 = vst [vmem:[%s244 + $0x80] sm:$0xff] %v878
        %1031 = vst [vmem:[%s244 + $0x88] sm:$0xff] %v967
        %1032 = vst [vmem:[%s244 + $0x90] sm:$0xff] %v881
        %1033 = vst [vmem:[%s244 + $0x98] sm:$0xff] %v970
        %1034 = vst [vmem:[%s244 + $0xa0] sm:$0xff] %v884
        %1035 = vst [vmem:[%s244 + $0xa8] sm:$0xff] %v973
        %1036 = vst [vmem:[%s244 + $0xb0] sm:$0xff] %v887
        %1037 = vst [vmem:[%s244 + $0xb8] sm:$0xff] %v976
        %1038 = vst [vmem:[%s244 + $0xc0] sm:$0xff] %v890
        %1039 = vst [vmem:[%s244 + $0xc8] sm:$0xff] %v979
        %1040 = vst [vmem:[%s244 + $0xd0] sm:$0xff] %v893
        %1041 = vst [vmem:[%s244 + $0xd8] sm:$0xff] %v982
        %1042 = vst [vmem:[%s244 + $0xe0] sm:$0xff] %v896
        %1043 = vst [vmem:[%s244 + $0xe8] sm:$0xff] %v985
        %1044 = vst [vmem:[%s244 + $0xf0] sm:$0xff] %v899
        %1045 = vst [vmem:[%s244 + $0xf8] sm:$0xff] %v988
        %1046 = vst [vmem:[%s244 + $0x100] sm:$0xff] %v902
        %1047 = vst [vmem:[%s244 + $0x108] sm:$0xff] %v991
        %1048 = vst [vmem:[%s244 + $0x110] sm:$0xff] %v905
        %1049 = vst [vmem:[%s244 + $0x118] sm:$0xff] %v994
        %1050 = vst [vmem:[%s244 + $0x120] sm:$0xff] %v908
        %1051 = vst [vmem:[%s244 + $0x128] sm:$0xff] %v997
        %1052 = vst [vmem:[%s244 + $0x130] sm:$0xff] %v911
        %1053 = vst [vmem:[%s244 + $0x138] sm:$0xff] %v1000
        %1054 = vst [vmem:[%s244 + $0x140] sm:$0xff] %v914
        %1055 = vst [vmem:[%s244 + $0x148] sm:$0xff] %v1003
        %1056 = vst [vmem:[%s244 + $0x150] sm:$0xff] %v917
        %1057 = vst [vmem:[%s244 + $0x158] sm:$0xff] %v1006
        %1058 = vst [vmem:[%s244 + $0x160] sm:$0xff] %v920
        %1059 = vst [vmem:[%s244 + $0x168] sm:$0xff] %v1009
        %1060 = vst [vmem:[%s244 + $0x170] sm:$0xff] %v923
        %1061 = vst [vmem:[%s244 + $0x178] sm:$0xff] %v1012
        %s1062 = sand.u32 %s159, 1
        %s1063 = scalar_lea.sflag [#allocation3], %s1062
        %s1064 = sand.u32 %s159, 1
        %s1065 = smul.addr %s1064, 384
        %s1066 = scalar_lea.vmem [#allocation2], %s1065
        // Predicated region
        $region45: #{tpu_custom_call.1} parent=43 // pred_check
          %p1067 = pneg %p169
        $region46: #{tpu_custom_call.1} parent=43 // pred_check_branch
          %1069 = sbr.rel (%p1067) target = $region48
        $region47: #{tpu_custom_call.1} parent=43 // pred_region
          %1071 = vsyncadd %s1063, 0
          %s1072 = smul.addr %s20, 48
          %s1073 = smul.addr %s1072, 8
          %s1074 = scalar_lea.hbm %s6, %s1073
          %s1075 = sshll.u32 %s1066, 4
          %s1076 = int_to_ptr.vmem [resolvable:$true] %s1075
          %s1077 = sshll.u32 %s1074, 4
          %s1078 = int_to_ptr.hbm [resolvable:$true] %s1077
          %1083 = dma.vmem_to_hbm [thread:$0]  %s1076, 6144, %s1078, %s1063, 256, 256, 16
        $region48: #{tpu_custom_call.1} parent=43 // pred_fallthru
          _
      $region44: #{tpu_custom_call.1} parent=5 // pred_fallthru
        _
      %p1084 = scmp.le.s32.totalorder 2, %s15
      // Predicated region
      $region49: #{tpu_custom_call.1} parent=5 // pred_check
        %p1085 = pneg %p1084
      $region50: #{tpu_custom_call.1} parent=5 // pred_check_branch
        %1087 = sbr.rel (%p1085) target = $region52
      $region51: #{tpu_custom_call.1} parent=5 // pred_region
        %s1088 = ssub.s32 %s15, 2
        // Predicated region
        $region53: #{tpu_custom_call.1} parent=51 // pred_check
          %p1089 = pneg %p175
        $region54: #{tpu_custom_call.1} parent=51 // pred_check_branch
          %1091 = sbr.rel (%p1089) target = $region56
        $region55: #{tpu_custom_call.1} parent=51 // pred_region
          %s1092 = sand.u32 %s160, 1
          %s1093 = scalar_lea.sflag [#allocation3], %s1092
          %s1094 = sand.u32 %s160, 1
          %s1095 = smul.addr %s1094, 384
          %s1096 = scalar_lea.vmem [#allocation2], %s1095
          %1098 = dma.done %s1093, 6144
        $region56: #{tpu_custom_call.1} parent=51 // pred_fallthru
          _
      $region52: #{tpu_custom_call.1} parent=5 // pred_fallthru
        _
    $region6: #{tpu_custom_call.1} parent=1 // loop_footer
      %s19 = sadd.s32 1, %s15
    $region7: #{tpu_custom_call.1} parent=1 // loop_footer_branch
      %14 = sbr.rel target = $region3
    $region8: #{tpu_custom_call.1} parent=1 // loop_exit
      _
    %1099 = vsyncpa [#allocation3], 1
    %s1100 = scalar_lea.sflag [#allocation3], 1
    %1101 = vsyncpa %s1100, 1

</llo_original>
